<compile_context>
chip_gen: v7x
topology: tpu7x:2x2x1
jax: 0.10.0
libtpu: 0.0.40
codegen_flags: <defaults>
</compile_context>

<pallas_src>
import math
import functools

import jax
import jax.numpy as jnp
from jax import lax
from jax.experimental import pallas as pl
from jax.experimental.pallas import tpu as pltpu

_INV_SQRT2 = 1.0 / math.sqrt(2.0)


def _gelu(x):
    # exact (erf-based) GELU, matching torch.nn.functional.gelu default
    return 0.5 * x * (1.0 + lax.erf(x * _INV_SQRT2))


def _round_up(x, m):
    return (x + m - 1) // m * m


# ----------------------------------------------------------------------------
# Pallas kernel 1: fused matmul + bias (+ residual) — bf16 operands, f32 acc.
# Used for: conv2d (via im2col), fully_connected, GRU input projections.
# ----------------------------------------------------------------------------
def _mm_kernel(a_ref, b_ref, bias_ref, *rest, apply_gelu, has_residual):
    if has_residual:
        res_ref, o_ref = rest
    else:
        (o_ref,) = rest
    acc = jnp.dot(a_ref[...], b_ref[...], preferred_element_type=jnp.float32)
    acc = acc + bias_ref[...]
    if has_residual:
        acc = acc + res_ref[...]
    if apply_gelu:
        acc = _gelu(acc)
    o_ref[...] = acc


def matmul_bias(a, b, bias, residual=None, apply_gelu=False):
    """(M,K)@(K,N) + bias [+ residual] [then GELU]; handles arbitrary M, N."""
    M, K = a.shape
    K2, N = b.shape
    assert K == K2

    if M <= 256:
        tm = _round_up(M, 8)
        Mp = tm
    else:
        tm = 256
        Mp = _round_up(M, tm)
    if N <= 2048:
        tn = N
        Np = N
    else:
        tn = 1024
        Np = _round_up(N, tn)

    a_p = a.astype(jnp.bfloat16)
    if Mp != M:
        a_p = jnp.pad(a_p, ((0, Mp - M), (0, 0)))
    b_p = b.astype(jnp.bfloat16)
    bias_p = bias.reshape(1, N).astype(jnp.float32)
    if Np != N:
        b_p = jnp.pad(b_p, ((0, 0), (0, Np - N)))
        bias_p = jnp.pad(bias_p, ((0, 0), (0, Np - N)))

    in_specs = [
        pl.BlockSpec((tm, K), lambda i, j: (i, 0)),
        pl.BlockSpec((K, tn), lambda i, j: (0, j)),
        pl.BlockSpec((1, tn), lambda i, j: (0, j)),
    ]
    args = [a_p, b_p, bias_p]
    if residual is not None:
        r_p = residual.astype(jnp.float32)
        if Mp != M or Np != N:
            r_p = jnp.pad(r_p, ((0, Mp - M), (0, Np - N)))
        in_specs.append(pl.BlockSpec((tm, tn), lambda i, j: (i, j)))
        args.append(r_p)

    kernel = functools.partial(_mm_kernel, apply_gelu=apply_gelu,
                               has_residual=residual is not None)
    out = pl.pallas_call(
        kernel,
        out_shape=jax.ShapeDtypeStruct((Mp, Np), jnp.float32),
        grid=(Mp // tm, Np // tn),
        in_specs=in_specs,
        out_specs=pl.BlockSpec((tm, tn), lambda i, j: (i, j)),
        compiler_params=pltpu.CompilerParams(
            dimension_semantics=("parallel", "parallel")),
    )(*args)
    if Mp != M or Np != N:
        out = out[:M, :N]
    return out


# ----------------------------------------------------------------------------
# Pallas kernel 2: fused classifier  Linear(2H->H) + GELU + Linear(H->n_class)
# ----------------------------------------------------------------------------
def _classifier_kernel(x_ref, w1_ref, b1_ref, w2_ref, b2_ref, o_ref):
    h = jnp.dot(x_ref[...], w1_ref[...], preferred_element_type=jnp.float32)
    h = _gelu(h + b1_ref[...])
    o_ref[...] = (jnp.dot(h.astype(jnp.bfloat16), w2_ref[...],
                          preferred_element_type=jnp.float32) + b2_ref[...])


def classifier(x2d, w1, b1, w2, b2):
    M, K = x2d.shape
    H = w1.shape[0]
    C = w2.shape[0]
    if M <= 256:
        tm = _round_up(M, 8)
        Mp = tm
    else:
        tm = 256
        Mp = _round_up(M, tm)
    xp = x2d.astype(jnp.bfloat16)
    if Mp != M:
        xp = jnp.pad(xp, ((0, Mp - M), (0, 0)))
    out = pl.pallas_call(
        _classifier_kernel,
        out_shape=jax.ShapeDtypeStruct((Mp, C), jnp.float32),
        grid=(Mp // tm,),
        in_specs=[pl.BlockSpec((tm, K), lambda i: (i, 0)),
                  pl.BlockSpec((K, H), lambda i: (0, 0)),
                  pl.BlockSpec((1, H), lambda i: (0, 0)),
                  pl.BlockSpec((H, C), lambda i: (0, 0)),
                  pl.BlockSpec((1, C), lambda i: (0, 0))],
        out_specs=pl.BlockSpec((tm, C), lambda i: (i, 0)),
        compiler_params=pltpu.CompilerParams(dimension_semantics=("parallel",)),
    )(xp,
      w1.T.astype(jnp.bfloat16), b1.reshape(1, H).astype(jnp.float32),
      w2.T.astype(jnp.bfloat16), b2.reshape(1, C).astype(jnp.float32))
    return out[:M] if Mp != M else out


# ----------------------------------------------------------------------------
# Pallas kernel 3: LayerNorm over the LAST dim + GELU, row-tiled.
# Used by the BidirectionalGRU pre-norm.
# ----------------------------------------------------------------------------
def _ln_lastdim_gelu_kernel(x_ref, g_ref, b_ref, o_ref):
    x = x_ref[...]
    mean = jnp.mean(x, axis=-1, keepdims=True)
    var = jnp.mean(jnp.square(x - mean), axis=-1, keepdims=True)
    xn = (x - mean) * lax.rsqrt(var + 1e-5)
    o_ref[...] = _gelu(xn * g_ref[...] + b_ref[...])


def layernorm_gelu(x2d, gamma, beta):
    R, F = x2d.shape
    if R <= 512:
        tr = _round_up(R, 8)
        Rp = tr
    else:
        tr = 512
        Rp = _round_up(R, tr)
    xp = x2d.astype(jnp.float32)
    if Rp != R:
        xp = jnp.pad(xp, ((0, Rp - R), (0, 0)))
    out = pl.pallas_call(
        _ln_lastdim_gelu_kernel,
        out_shape=jax.ShapeDtypeStruct((Rp, F), jnp.float32),
        grid=(Rp // tr,),
        in_specs=[pl.BlockSpec((tr, F), lambda i: (i, 0)),
                  pl.BlockSpec((1, F), lambda i: (0, 0)),
                  pl.BlockSpec((1, F), lambda i: (0, 0))],
        out_specs=pl.BlockSpec((tr, F), lambda i: (i, 0)),
        compiler_params=pltpu.CompilerParams(dimension_semantics=("parallel",)),
    )(xp, gamma.reshape(1, F).astype(jnp.float32),
      beta.reshape(1, F).astype(jnp.float32))
    return out[:R] if Rp != R else out


# ----------------------------------------------------------------------------
# Pallas kernel 4: CNNLayerNorm + GELU, normalizing over the SUBLANE (n_feats)
# axis directly on the NHWC layout -> no transposes through HBM, full lanes.
# ----------------------------------------------------------------------------
def _ln_sublane_gelu_kernel(x_ref, g_ref, b_ref, o_ref):
    x = x_ref[0]                                     # (H, tl)
    mean = jnp.mean(x, axis=0, keepdims=True)
    var = jnp.mean(jnp.square(x - mean), axis=0, keepdims=True)
    xn = (x - mean) * lax.rsqrt(var + 1e-5)
    o_ref[0] = _gelu(xn * g_ref[...] + b_ref[...])


def cnn_layernorm_gelu(x_nhwc, gamma, beta):
    B, H, W, C = x_nhwc.shape
    L = W * C
    x3 = x_nhwc.reshape(B, H, L).astype(jnp.float32)
    if L <= 2048:
        tl = L
        Lp = L
    else:
        tl = 2048
        Lp = _round_up(L, tl)
    if Lp != L:
        x3 = jnp.pad(x3, ((0, 0), (0, 0), (0, Lp - L)))
    out = pl.pallas_call(
        _ln_sublane_gelu_kernel,
        out_shape=jax.ShapeDtypeStruct((B, H, Lp), jnp.float32),
        grid=(B, Lp // tl),
        in_specs=[pl.BlockSpec((1, H, tl), lambda b, l: (b, 0, l)),
                  pl.BlockSpec((H, 1), lambda b, l: (0, 0)),
                  pl.BlockSpec((H, 1), lambda b, l: (0, 0))],
        out_specs=pl.BlockSpec((1, H, tl), lambda b, l: (b, 0, l)),
        compiler_params=pltpu.CompilerParams(
            dimension_semantics=("parallel", "parallel")),
    )(x3, gamma.reshape(H, 1).astype(jnp.float32),
      beta.reshape(H, 1).astype(jnp.float32))
    if Lp != L:
        out = out[:, :, :L]
    return out.reshape(B, H, W, C)


# ----------------------------------------------------------------------------
# Pallas kernel 5: fused bidirectional GRU recurrence, time-blocked.
# Both directions run in ONE pallas_call; the backward direction gets its time
# index from the BlockSpec index_map (no [::-1] copies).  Hidden state is
# carried across grid steps in VMEM scratch; Tblk steps run per grid step.
# ----------------------------------------------------------------------------
def _bigru_kernel(gxf_ref, gxb_ref, whhf_ref, whhb_ref, bhhf_ref, bhhb_ref,
                  of_ref, ob_ref, hf_ref, hb_ref, *, tblk, hidden):
    i = pl.program_id(0)

    @pl.when(i == 0)
    def _():
        hf_ref[...] = jnp.zeros_like(hf_ref)
        hb_ref[...] = jnp.zeros_like(hb_ref)

    H = hidden
    whhf = whhf_ref[...]
    whhb = whhb_ref[...]
    bhhf = bhhf_ref[...]
    bhhb = bhhb_ref[...]

    def cell(gx, gh, h):
        r = jax.nn.sigmoid(gx[:, 0:H] + gh[:, 0:H])
        z = jax.nn.sigmoid(gx[:, H:2 * H] + gh[:, H:2 * H])
        n = jnp.tanh(gx[:, 2 * H:3 * H] + r * gh[:, 2 * H:3 * H])
        return (1.0 - z) * n + z * h

    for tt in range(tblk):                           # fully unrolled time block
        # forward direction: global time = i*tblk + tt
        hf = hf_ref[...]
        ghf = jnp.dot(hf.astype(jnp.bfloat16), whhf,
                      preferred_element_type=jnp.float32) + bhhf
        hf_new = cell(gxf_ref[tt], ghf, hf)
        hf_ref[...] = hf_new
        of_ref[tt] = hf_new
        # backward direction: global time = S-1 - (i*tblk + tt)
        tb = tblk - 1 - tt
        hb = hb_ref[...]
        ghb = jnp.dot(hb.astype(jnp.bfloat16), whhb,
                      preferred_element_type=jnp.float32) + bhhb
        hb_new = cell(gxb_ref[tb], ghb, hb)
        hb_ref[...] = hb_new
        ob_ref[tb] = hb_new


def bigru_seq_major(x_seq, p):
    """Fused bidirectional GRU over x_seq (S, N, I), h0 = 0 -> (S, N, 2H)."""
    S, N, I = x_seq.shape
    H = p["w_hh_f"].shape[1]                         # w_hh: (3H, H)
    x2d = x_seq.reshape(S * N, I)
    gx_f = matmul_bias(x2d, p["w_ih_f"].T, p["b_ih_f"]).reshape(S, N, 3 * H)
    gx_b = matmul_bias(x2d, p["w_ih_b"].T, p["b_ih_b"]).reshape(S, N, 3 * H)

    tblk = max(d for d in range(1, min(S, 16) + 1) if S % d == 0)
    nb = S // tblk

    kernel = functools.partial(_bigru_kernel, tblk=tblk, hidden=H)
    out_f, out_b = pl.pallas_call(
        kernel,
        out_shape=(jax.ShapeDtypeStruct((S, N, H), jnp.float32),
                   jax.ShapeDtypeStruct((S, N, H), jnp.float32)),
        grid=(nb,),
        in_specs=[pl.BlockSpec((tblk, N, 3 * H), lambda i: (i, 0, 0)),
                  pl.BlockSpec((tblk, N, 3 * H), lambda i: (nb - 1 - i, 0, 0)),
                  pl.BlockSpec((H, 3 * H), lambda i: (0, 0)),
                  pl.BlockSpec((H, 3 * H), lambda i: (0, 0)),
                  pl.BlockSpec((1, 3 * H), lambda i: (0, 0)),
                  pl.BlockSpec((1, 3 * H), lambda i: (0, 0))],
        out_specs=(pl.BlockSpec((tblk, N, H), lambda i: (i, 0, 0)),
                   pl.BlockSpec((tblk, N, H), lambda i: (nb - 1 - i, 0, 0))),
        scratch_shapes=[pltpu.VMEM((N, H), jnp.float32),
                        pltpu.VMEM((N, H), jnp.float32)],
        compiler_params=pltpu.CompilerParams(
            dimension_semantics=("arbitrary",)),
    )(gx_f, gx_b,
      p["w_hh_f"].T.astype(jnp.bfloat16), p["w_hh_b"].T.astype(jnp.bfloat16),
      p["b_hh_f"].reshape(1, 3 * H).astype(jnp.float32),
      p["b_hh_b"].reshape(1, 3 * H).astype(jnp.float32))
    # TODO(synk): add a leading "parallel" direction grid axis so v7x megacore
    # can run the two directions on the two TensorCores.
    return jnp.concatenate([out_f, out_b], axis=-1)


# ----------------------------------------------------------------------------
# Conv2d via im2col (patch extraction is glue; the matmul runs in Pallas)
# ----------------------------------------------------------------------------
def conv2d_nhwc(x, w_pt, b, stride, pad, residual=None):
    # TODO(synk): stream the k*k taps through a reduction grid axis with halo
    # DMA instead of materializing the im2col patches tensor in HBM.
    B, H, W, Cin = x.shape
    Cout, _, k, _ = w_pt.shape
    xp = jnp.pad(x, ((0, 0), (pad, pad), (pad, pad), (0, 0)))
    Ho = (H + 2 * pad - k) // stride + 1
    Wo = (W + 2 * pad - k) // stride + 1
    cols = []
    for kh in range(k):
        for kw in range(k):
            cols.append(xp[:, kh:kh + stride * Ho:stride,
                           kw:kw + stride * Wo:stride, :])
    patches = jnp.stack(cols, axis=3).reshape(B * Ho * Wo, k * k * Cin)
    w2d = jnp.transpose(w_pt, (2, 3, 1, 0)).reshape(k * k * Cin, Cout)
    res2d = None if residual is None else residual.reshape(B * Ho * Wo, Cout)
    out = matmul_bias(patches, w2d, b, residual=res2d)
    return out.reshape(B, Ho, Wo, Cout)


def residual_cnn(x, p):
    residual = x
    y = cnn_layernorm_gelu(x, p["ln1_g"], p["ln1_b"])   # dropout1 = identity (eval)
    y = conv2d_nhwc(y, p["cnn1_w"], p["cnn1_b"], stride=1, pad=1)
    y = cnn_layernorm_gelu(y, p["ln2_g"], p["ln2_b"])   # dropout2 = identity (eval)
    y = conv2d_nhwc(y, p["cnn2_w"], p["cnn2_b"], stride=1, pad=1, residual=residual)
    return y


# ----------------------------------------------------------------------------
# Full model forward
# ----------------------------------------------------------------------------
def speech_model_forward(x_nchw, params):
    # x: (B, 1, n_feats, time) NCHW -> NHWC
    x = jnp.transpose(x_nchw, (0, 2, 3, 1))
    x = conv2d_nhwc(x, params["cnn_w"], params["cnn_b"], stride=2, pad=1)
    for p in params["rescnn"]:
        x = residual_cnn(x, p)
    B, H, W, C = x.shape
    # torch: view(B, C*H, W).transpose(1, 2) -> (B, W, C*H) with feature = c*H + h
    x = jnp.transpose(x, (0, 2, 3, 1)).reshape(B, W, C * H)
    x = matmul_bias(x.reshape(B * W, C * H),
                    params["fc_w"].T, params["fc_b"]).reshape(B, W, -1)
    for p in params["birnn"]:
        d0, d1, F = x.shape
        xf = layernorm_gelu(x.reshape(d0 * d1, F),
                            p["ln_g"], p["ln_b"]).reshape(d0, d1, F)
        if p["batch_first"]:
            seq = jnp.transpose(xf, (1, 0, 2))            # (T, B, F)
            x = jnp.transpose(bigru_seq_major(seq, p), (1, 0, 2))
        else:
            # faithful to the torch code: (B, T, F) fed to a batch_first=False
            # GRU, so dim0 is treated as the sequence axis.
            x = bigru_seq_major(xf, p)
        # BiGRU dropout = identity (eval)
    d0, d1, F = x.shape
    y = classifier(x.reshape(d0 * d1, F),
                   params["cls_w1"], params["cls_b1"],
                   params["cls_w2"], params["cls_b2"])   # dropout = identity
    return y.reshape(d0, d1, -1)


# ----------------------------------------------------------------------------
# Deterministic parameter init (synthetic; shapes follow the torch __init__)
# ----------------------------------------------------------------------------
def init_params(key, n_cnn_layers, n_rnn_layers, rnn_dim, n_class, n_feats):
    nf = n_feats // 2
    keys = iter(jax.random.split(key, 512))

    def nrm(shape, scale=0.1):
        return scale * jax.random.normal(next(keys), shape, dtype=jnp.float32)

    params = {
        "cnn_w": nrm((32, 1, 3, 3)), "cnn_b": nrm((32,)),
        "rescnn": [], "birnn": [],
        "fc_w": nrm((rnn_dim, nf * 32)), "fc_b": nrm((rnn_dim,)),
        "cls_w1": nrm((rnn_dim, rnn_dim * 2)), "cls_b1": nrm((rnn_dim,)),
        "cls_w2": nrm((n_class, rnn_dim)), "cls_b2": nrm((n_class,)),
    }
    for _ in range(n_cnn_layers):
        params["rescnn"].append({
            "ln1_g": jnp.ones((nf,), jnp.float32), "ln1_b": jnp.zeros((nf,), jnp.float32),
            "ln2_g": jnp.ones((nf,), jnp.float32), "ln2_b": jnp.zeros((nf,), jnp.float32),
            "cnn1_w": nrm((32, 32, 3, 3)), "cnn1_b": nrm((32,)),
            "cnn2_w": nrm((32, 32, 3, 3)), "cnn2_b": nrm((32,)),
        })
    for i in range(n_rnn_layers):
        in_dim = rnn_dim if i == 0 else rnn_dim * 2
        H = rnn_dim
        p = {"batch_first": (i == 0),
             "ln_g": jnp.ones((in_dim,), jnp.float32),
             "ln_b": jnp.zeros((in_dim,), jnp.float32)}
        for d in ("f", "b"):
            p[f"w_ih_{d}"] = nrm((3 * H, in_dim))
            p[f"w_hh_{d}"] = nrm((3 * H, H))
            p[f"b_ih_{d}"] = nrm((3 * H,))
            p[f"b_hh_{d}"] = nrm((3 * H,))
        params["birnn"].append(p)
    return params


if __name__ == "__main__":
    key = jax.random.PRNGKey(0)
    k_x, k_p = jax.random.split(key)

    B, n_feats, T = 2, 16, 16
    n_cnn_layers, n_rnn_layers, rnn_dim, n_class = 2, 2, 32, 10

    x = jax.random.normal(k_x, (B, 1, n_feats, T), dtype=jnp.float32)
    params = init_params(k_p, n_cnn_layers, n_rnn_layers, rnn_dim, n_class, n_feats)

    out = speech_model_forward(x, params)
    out = jax.block_until_ready(out)
    assert out.shape == (B, T // 2, n_class), out.shape
    assert bool(jnp.all(jnp.isfinite(out)))
    print("KERNEL_OK")
</pallas_src>

<mosaic_0001>
module attributes {stable_mosaic.version = 11 : i64} {
  func.func @_mm_kernel(%arg0: i32, %arg1: i32, %arg2: memref<128x9xbf16, #tpu.memory_space<vmem>>, %arg3: memref<9x32xbf16, #tpu.memory_space<vmem>>, %arg4: memref<1x32xf32, #tpu.memory_space<vmem>>, %arg5: memref<128x32xf32, #tpu.memory_space<vmem>>) attributes {dimension_semantics = [#tpu.dimension_semantics<parallel>, #tpu.dimension_semantics<parallel>], iteration_bounds = array<i64: 1, 1>, scalar_prefetch = 0 : i64, scratch_operands = 0 : i64, tpu.core_type = #tpu.core_type<tc>, window_params = [{transform_indices = @transform_0, window_bounds = array<i64: 128, 9>}, {transform_indices = @transform_1, window_bounds = array<i64: 9, 32>}, {transform_indices = @transform_2, window_bounds = array<i64: 1, 32>}, {transform_indices = @transform_3, window_bounds = array<i64: 128, 32>}]} {
    %c0 = arith.constant 0 : index
    %c0_0 = arith.constant 0 : index
    %0 = vector.load %arg2[%c0, %c0_0] : memref<128x9xbf16, #tpu.memory_space<vmem>>, vector<128x9xbf16>
    %c0_1 = arith.constant 0 : index
    %c0_2 = arith.constant 0 : index
    %1 = vector.load %arg3[%c0_1, %c0_2] : memref<9x32xbf16, #tpu.memory_space<vmem>>, vector<9x32xbf16>
    %cst = arith.constant dense<0.000000e+00> : vector<128x32xf32>
    %2 = tpu.matmul %0, %1, %cst {dimension_numbers = #tpu.dot_dimension_numbers<[1], [0], [0], [1], [0, 0, 1, 1], [], []>} : vector<128x9xbf16>, vector<9x32xbf16>, vector<128x32xf32> -> vector<128x32xf32>
    %c0_3 = arith.constant 0 : index
    %c0_4 = arith.constant 0 : index
    %3 = vector.load %arg4[%c0_3, %c0_4] : memref<1x32xf32, #tpu.memory_space<vmem>>, vector<1x32xf32>
    %4 = vector.broadcast %3 : vector<1x32xf32> to vector<128x32xf32>
    %5 = arith.addf %2, %4 : vector<128x32xf32>
    %c0_5 = arith.constant 0 : index
    %c0_6 = arith.constant 0 : index
    %6 = vector.load %arg5[%c0_5, %c0_6] : memref<128x32xf32, #tpu.memory_space<vmem>>, vector<128x32xf32>
    tpu.vector_store %arg5[%c0_5, %c0_6], %5 {strides = array<i32>} : memref<128x32xf32, #tpu.memory_space<vmem>>, vector<128x32xf32>,
    return
  }
  func.func @transform_0(%arg0: i32, %arg1: i32) -> (i32, i32) {
    %c0_i32 = arith.constant 0 : i32
    %c0_i32_0 = arith.constant 0 : i32
    return %arg0, %c0_i32 : i32, i32
  }
  func.func @transform_1(%arg0: i32, %arg1: i32) -> (i32, i32) {
    %c0_i32 = arith.constant 0 : i32
    %c0_i32_0 = arith.constant 0 : i32
    return %c0_i32, %arg1 : i32, i32
  }
  func.func @transform_2(%arg0: i32, %arg1: i32) -> (i32, i32) {
    %c0_i32 = arith.constant 0 : i32
    %c0_i32_0 = arith.constant 0 : i32
    return %c0_i32, %arg1 : i32, i32
  }
  func.func @transform_3(%arg0: i32, %arg1: i32) -> (i32, i32) {
    %c0_i32 = arith.constant 0 : i32
    return %arg0, %arg1 : i32, i32
  }
}

</mosaic_0001>

<llo_original>
// kernel: tpu_custom_call.1
$region0: #{tpu_custom_call.1}
  #allocation0 [shape = 'u32[]', space=smem, size = 0x4, offset = 0x4, fixed_abs, tag = 'smem constant byte address 0x4 - core index']
  #allocation1 [shape = 'u32[144,128]{1,0:T(1,128)}', space=vmem, size = 0x12000, scoped, tag = 'internal scratch']
  %s0 = inlined_call_operand.vmem [shape: bf16[128,9], index: 0, kind: input, shape index: {}]
  %s1 = inlined_call_operand.vmem [shape: bf16[9,32], index: 1, kind: input, shape index: {}]
  %s2 = inlined_call_operand.vmem [shape: f32[1,32], index: 2, kind: input, shape index: {}]
  %s3 = inlined_call_operand.vmem [shape: f32[128,32], index: 3, kind: output, shape index: {}]
  %s4 = sld [smem:[#allocation0]]
  $region22: #{tpu_custom_call.1} parent=0
    _
  %s6 = ssub.s32 1, %s4
  %s7 = scalar_select 0, %s6, %s4
  // Predicated region
  $region2: #{tpu_custom_call.1} parent=0 // pred_check
    _
  $region3: #{tpu_custom_call.1} parent=0 // pred_check_branch
    %9 = sbr.rel (0) target = $region5
  $region4: #{tpu_custom_call.1} parent=0 // pred_region
    _
  $region5: #{tpu_custom_call.1} parent=0 // pred_fallthru
    _
  // Predicated region
  $region6: #{tpu_custom_call.1} parent=0 // pred_check
    _
  $region7: #{tpu_custom_call.1} parent=0 // pred_check_branch
    %11 = sbr.rel (0) target = $region9
  $region8: #{tpu_custom_call.1} parent=0 // pred_region
    _
  $region9: #{tpu_custom_call.1} parent=0 // pred_fallthru
    _
  // Predicated region
  $region10: #{tpu_custom_call.1} parent=0 // pred_check
    _
  $region11: #{tpu_custom_call.1} parent=0 // pred_check_branch
    %13 = sbr.rel (0) target = $region13
  $region12: #{tpu_custom_call.1} parent=0 // pred_region
    _
  $region13: #{tpu_custom_call.1} parent=0 // pred_fallthru
    _
  %v15 = vld [vmem:[%s0] sm:$0xf]
  %v16 = vld [vmem:[%s0 + $0x4] sm:$0xf]
  %v17 = vld [vmem:[%s0 + $0x8] sm:$0xf]
  %v18 = vld [vmem:[%s0 + $0xc] sm:$0xf]
  %v19 = vld [vmem:[%s0 + $0x10] sm:$0xf]
  %v20 = vld [vmem:[%s0 + $0x14] sm:$0xf]
  %v21 = vld [vmem:[%s0 + $0x18] sm:$0xf]
  %v22 = vld [vmem:[%s0 + $0x1c] sm:$0xf]
  %v23 = vld [vmem:[%s0 + $0x20] sm:$0xf]
  %v24 = vld [vmem:[%s0 + $0x24] sm:$0xf]
  %v25 = vld [vmem:[%s0 + $0x28] sm:$0xf]
  %v26 = vld [vmem:[%s0 + $0x2c] sm:$0xf]
  %v27 = vld [vmem:[%s0 + $0x30] sm:$0xf]
  %v28 = vld [vmem:[%s0 + $0x34] sm:$0xf]
  %v29 = vld [vmem:[%s0 + $0x38] sm:$0xf]
  %v30 = vld [vmem:[%s0 + $0x3c] sm:$0xf]
  %v31 = vld [vmem:[%s1] sm:$0xf]
  %v32 = vld [vmem:[%s1 + $0x4] sm:$0x1]
  %v33 = vld [vmem:[%s2] sm:$0x1]
  %v35 = vlaneseq
  %v36 = vshrl.u32 %v35, 7
  %v37 = vsub.s32 0, %v36
  %v38 = vrot.slane %v33, %v37
  %v56 = vunpack.c.l.b16 %v15
  %v57 = vunpack.c.l.b16 %v16
  %v58 = vunpack.c.l.b16 %v17
  %v59 = vunpack.c.l.b16 %v18
  %v60 = vunpack.c.l.b16 %v19
  %v61 = vunpack.c.l.b16 %v20
  %v62 = vunpack.c.l.b16 %v21
  %v63 = vunpack.c.l.b16 %v22
  %v64 = vunpack.c.l.b16 %v23
  %v65 = vunpack.c.l.b16 %v24
  %v66 = vunpack.c.l.b16 %v25
  %v67 = vunpack.c.l.b16 %v26
  %v68 = vunpack.c.l.b16 %v27
  %v69 = vunpack.c.l.b16 %v28
  %v70 = vunpack.c.l.b16 %v29
  %v71 = vunpack.c.l.b16 %v30
  %v72 = vpack.c.b16 %v57, %v56
  %v73 = vpack.c.b16 %v59, %v58
  %v74 = vpack.c.b16 %v61, %v60
  %v75 = vpack.c.b16 %v63, %v62
  %v76 = vpack.c.b16 %v65, %v64
  %v77 = vpack.c.b16 %v67, %v66
  %v78 = vpack.c.b16 %v69, %v68
  %v79 = vpack.c.b16 %v71, %v70
  %v82 = vunpack.c.l.b16 %v31
  %v83 = vunpack.c.l.b16 %v32
  %v84 = vpack.c.b16 %v83, %v82
  %vm85 = vcmask 72704
  %v87 = vsel %vm85, %v72, 0
  %v90 = vsel %vm85, %v73, 0
  %v93 = vsel %vm85, %v74, 0
  %v96 = vsel %vm85, %v75, 0
  %v99 = vsel %vm85, %v76, 0
  %v102 = vsel %vm85, %v77, 0
  %v105 = vsel %vm85, %v78, 0
  %v108 = vsel %vm85, %v79, 0
  %vm110 = vcmask 1043456
  %vm111 = vcmask 1044480
  %v112 = vsel %vm110, 4294967295, 65535
  %v113 = vsel %vm111, %v112, 0
  %v115 = vand.u32 %v84, %v113
  %117 = vmatprep.subr.bf16.mxu0 0
  %118 = vmatpush1.bf16.msra.mxu0 %v115
  %119 = vmatprep.subr.bf16.mxu0 0
  %120 = vmatpush1.bf16.msra.mxu0 0
  %121 = vmatprep.subr.bf16.mxu0 0
  %122 = vmatpush1.bf16.msra.mxu0 0
  %123 = vmatprep.subr.bf16.mxu0 0
  %124 = vmatpush1.bf16.msra.mxu0 0
  %125 = vmatprep.subr.bf16.mxu0 0
  %126 = vmatpush1.bf16.msra.mxu0 0
  %127 = vmatprep.subr.bf16.mxu0 0
  %128 = vmatpush1.bf16.msra.mxu0 0
  %129 = vmatprep.subr.bf16.mxu0 0
  %130 = vmatpush1.bf16.msra.mxu0 0
  %131 = vmatprep.subr.bf16.mxu0 0
  %132 = vmatpush1.bf16.msra.mxu0 0
  %133 = vmatprep.subr.bf16.mxu0 0
  %134 = vmatpush1.bf16.msra.mxu0 0
  %135 = vmatprep.subr.bf16.mxu0 0
  %136 = vmatpush1.bf16.msra.mxu0 0
  %137 = vmatprep.subr.bf16.mxu0 0
  %138 = vmatpush1.bf16.msra.mxu0 0
  %139 = vmatprep.subr.bf16.mxu0 0
  %140 = vmatpush1.bf16.msra.mxu0 0
  %141 = vmatprep.subr.bf16.mxu0 0
  %142 = vmatpush1.bf16.msra.mxu0 0
  %143 = vmatprep.subr.bf16.mxu0 0
  %144 = vmatpush1.bf16.msra.mxu0 0
  %145 = vmatprep.subr.bf16.mxu0 0
  %146 = vmatpush1.bf16.msra.mxu0 0
  %147 = vmatprep.subr.bf16.mxu0 0
  %148 = vmatpush1.bf16.msra.mxu0 0
  %149 = vmatprep.mubr.bf16.mxu0 0
  %150 = vmatmul.mubr.bf16.gmra.mrb[0].mxu0 %v87
  %v151 = vpop.f32.mrb[0].mxu0
  %v152 = vadd.f32 %v38, %v151
  %v153 = vpop.f32.mrb[0].mxu0
  %v154 = vpop.f32.mrb[0].mxu0
  %v155 = vadd.f32 %v38, %v154
  %v156 = vpop.f32.mrb[0].mxu0
  %157 = vmatprep.mubr.bf16.mxu0 0
  %158 = vmatmul.mubr.bf16.gmra.mrb[0].mxu0 %v90
  %v159 = vpop.f32.mrb[0].mxu0
  %v160 = vadd.f32 %v38, %v159
  %v161 = vpop.f32.mrb[0].mxu0
  %v162 = vpop.f32.mrb[0].mxu0
  %v163 = vadd.f32 %v38, %v162
  %v164 = vpop.f32.mrb[0].mxu0
  %165 = vmatprep.mubr.bf16.mxu0 0
  %166 = vmatmul.mubr.bf16.gmra.mrb[0].mxu0 %v93
  %v167 = vpop.f32.mrb[0].mxu0
  %v168 = vadd.f32 %v38, %v167
  %v169 = vpop.f32.mrb[0].mxu0
  %v170 = vpop.f32.mrb[0].mxu0
  %v171 = vadd.f32 %v38, %v170
  %v172 = vpop.f32.mrb[0].mxu0
  %173 = vmatprep.mubr.bf16.mxu0 0
  %174 = vmatmul.mubr.bf16.gmra.mrb[0].mxu0 %v96
  %v175 = vpop.f32.mrb[0].mxu0
  %v176 = vadd.f32 %v38, %v175
  %v177 = vpop.f32.mrb[0].mxu0
  %v178 = vpop.f32.mrb[0].mxu0
  %v179 = vadd.f32 %v38, %v178
  %v180 = vpop.f32.mrb[0].mxu0
  %181 = vmatprep.mubr.bf16.mxu0 0
  %182 = vmatmul.mubr.bf16.gmra.mrb[0].mxu0 %v99
  %v183 = vpop.f32.mrb[0].mxu0
  %v184 = vadd.f32 %v38, %v183
  %v185 = vpop.f32.mrb[0].mxu0
  %v186 = vpop.f32.mrb[0].mxu0
  %v187 = vadd.f32 %v38, %v186
  %v188 = vpop.f32.mrb[0].mxu0
  %189 = vmatprep.mubr.bf16.mxu0 0
  %190 = vmatmul.mubr.bf16.gmra.mrb[0].mxu0 %v102
  %v191 = vpop.f32.mrb[0].mxu0
  %v192 = vadd.f32 %v38, %v191
  %v193 = vpop.f32.mrb[0].mxu0
  %v194 = vpop.f32.mrb[0].mxu0
  %v195 = vadd.f32 %v38, %v194
  %v196 = vpop.f32.mrb[0].mxu0
  %197 = vmatprep.mubr.bf16.mxu0 0
  %198 = vmatmul.mubr.bf16.gmra.mrb[0].mxu0 %v105
  %v199 = vpop.f32.mrb[0].mxu0
  %v200 = vadd.f32 %v38, %v199
  %v201 = vpop.f32.mrb[0].mxu0
  %v202 = vpop.f32.mrb[0].mxu0
  %v203 = vadd.f32 %v38, %v202
  %v204 = vpop.f32.mrb[0].mxu0
  %205 = vmatprep.mubr.bf16.mxu0 0
  %206 = vmatmul.mubr.bf16.gmra.mrb[0].mxu0 %v108
  %v207 = vpop.f32.mrb[0].mxu0
  %v208 = vadd.f32 %v38, %v207
  %v209 = vpop.f32.mrb[0].mxu0
  %v210 = vpop.f32.mrb[0].mxu0
  %v211 = vadd.f32 %v38, %v210
  %v212 = vpop.f32.mrb[0].mxu0
  %213 = vdwg.mxu0
  %vm214 = vcmask 261120
  %215 = vst.msk [vmem:[%s3] sm:$0xff] %vm214, %v152
  %216 = vst.msk [vmem:[%s3 + $0x8] sm:$0xff] %vm214, %v155
  %217 = vst.msk [vmem:[%s3 + $0x10] sm:$0xff] %vm214, %v160
  %218 = vst.msk [vmem:[%s3 + $0x18] sm:$0xff] %vm214, %v163
  %219 = vst.msk [vmem:[%s3 + $0x20] sm:$0xff] %vm214, %v168
  %220 = vst.msk [vmem:[%s3 + $0x28] sm:$0xff] %vm214, %v171
  %221 = vst.msk [vmem:[%s3 + $0x30] sm:$0xff] %vm214, %v176
  %222 = vst.msk [vmem:[%s3 + $0x38] sm:$0xff] %vm214, %v179
  %223 = vst.msk [vmem:[%s3 + $0x40] sm:$0xff] %vm214, %v184
  %224 = vst.msk [vmem:[%s3 + $0x48] sm:$0xff] %vm214, %v187
  %225 = vst.msk [vmem:[%s3 + $0x50] sm:$0xff] %vm214, %v192
  %226 = vst.msk [vmem:[%s3 + $0x58] sm:$0xff] %vm214, %v195
  %227 = vst.msk [vmem:[%s3 + $0x60] sm:$0xff] %vm214, %v200
  %228 = vst.msk [vmem:[%s3 + $0x68] sm:$0xff] %vm214, %v203
  %229 = vst.msk [vmem:[%s3 + $0x70] sm:$0xff] %vm214, %v208
  %230 = vst.msk [vmem:[%s3 + $0x78] sm:$0xff] %vm214, %v211
  // Predicated region
  $region14: #{tpu_custom_call.1} parent=0 // pred_check
    _
  $region15: #{tpu_custom_call.1} parent=0 // pred_check_branch
    %232 = sbr.rel (0) target = $region17
  $region16: #{tpu_custom_call.1} parent=0 // pred_region
    _
  $region17: #{tpu_custom_call.1} parent=0 // pred_fallthru
    _
  // Predicated region
  $region18: #{tpu_custom_call.1} parent=0 // pred_check
    _
  $region19: #{tpu_custom_call.1} parent=0 // pred_check_branch
    %234 = sbr.rel (0) target = $region21
  $region20: #{tpu_custom_call.1} parent=0 // pred_region
    _
  $region21: #{tpu_custom_call.1} parent=0 // pred_fallthru
    _

</llo_original>
